<compile_context>
chip_gen: v6e
topology: v6e:2x2x1
jax: 0.10.0
libtpu: 0.0.40
codegen_flags: <defaults>
</compile_context>

<pallas_src>
import functools

import jax
import jax.numpy as jnp
from jax.experimental import pallas as pl
from jax.experimental.pallas import tpu as pltpu


def _round_up(x, m):
    return ((x + m - 1) // m) * m


# ---------------------------------------------------------------------------
# Pass 1: global BN statistics (sum, sum of squares) of h = x @ W1 + b1.
# Grid axis is a reduction -> "arbitrary"; accumulators live in VMEM scratch
# and are written to the (resident) outputs on the last grid step.
# ---------------------------------------------------------------------------
def _stats_kernel(x_ref, w1_ref, b1_ref, sum_ref, sumsq_ref, acc_s, acc_ss,
                  *, tm, m_real):
    i = pl.program_id(0)

    @pl.when(i == 0)
    def _():
        acc_s[...] = jnp.zeros_like(acc_s)
        acc_ss[...] = jnp.zeros_like(acc_ss)

    h = jnp.dot(x_ref[...], w1_ref[...],
                preferred_element_type=jnp.float32) + b1_ref[...]

    # Mask rows that are only padding (M was rounded up to a multiple of TM).
    rows = i * tm + jax.lax.broadcasted_iota(jnp.int32, (tm, 1), 0)
    h = jnp.where(rows < m_real, h, 0.0)

    acc_s[...] += jnp.sum(h, axis=0, keepdims=True)
    acc_ss[...] += jnp.sum(h * h, axis=0, keepdims=True)

    @pl.when(i == pl.num_programs(0) - 1)
    def _():
        sum_ref[...] = acc_s[...]
        sumsq_ref[...] = acc_ss[...]


# ---------------------------------------------------------------------------
# Pass 2: fused (BN-folded) fc1 -> ReLU -> fc2 on independent row tiles.
# ---------------------------------------------------------------------------
def _fused_kernel(x_ref, w1_ref, b1_ref, w2_ref, b2_ref, o_ref):
    h = jnp.dot(x_ref[...], w1_ref[...],
                preferred_element_type=jnp.float32) + b1_ref[...]
    h = jnp.maximum(h, 0.0)
    out = jnp.dot(h, w2_ref[...],
                  preferred_element_type=jnp.float32) + b2_ref[...]
    o_ref[...] = out.astype(o_ref.dtype)


def node_decoder_forward(x, w1, b1, gamma, beta, w2, b2,
                         *, eps=1e-5, tm_target=512):
    """x: (B, N, Din) -> (B, N, E). Training-mode BatchNorm1d (biased variance)."""
    B, N, Din = x.shape
    H = w1.shape[1]
    E = w2.shape[1]
    M = B * N

    f32 = jnp.float32
    Hp = _round_up(H, 128)            # lane-align hidden dim for MXU / VPU
    Ep = _round_up(E, 128)            # lane-dense output stores (no masked vst)
    TM = min(tm_target, _round_up(M, 8))
    Mp = _round_up(M, TM)

    # Zero-pad everything; padded rows/channels contribute nothing and are
    # sliced away at the end.
    x2 = jnp.pad(x.reshape(M, Din).astype(f32), ((0, Mp - M), (0, 0)))
    w1p = jnp.pad(w1.astype(f32), ((0, 0), (0, Hp - H)))
    b1p = jnp.pad(b1.reshape(1, -1).astype(f32), ((0, 0), (0, Hp - H)))
    gammap = jnp.pad(gamma.reshape(1, -1).astype(f32), ((0, 0), (0, Hp - H)))
    betap = jnp.pad(beta.reshape(1, -1).astype(f32), ((0, 0), (0, Hp - H)))
    w2p = jnp.pad(w2.astype(f32), ((0, Hp - H), (0, Ep - E)))
    b2p = jnp.pad(b2.reshape(1, -1).astype(f32), ((0, 0), (0, Ep - E)))

    grid = (Mp // TM,)

    # Modest VMEM budget estimate (double-buffered tiles + resident weights +
    # intermediate), capped so it is safe on v7x's 64 MiB physical VMEM.
    est = 4 * (2 * TM * Din + 2 * TM * Ep + Din * Hp + Hp * Ep
               + 4 * Hp + Ep + TM * Hp)
    vmem_limit = min(64 * 1024 * 1024, max(16 * 1024 * 1024, 2 * est))

    # ---- pass 1: BN statistics --------------------------------------------
    stats_fn = functools.partial(_stats_kernel, tm=TM, m_real=M)
    s, ss = pl.pallas_call(
        stats_fn,
        out_shape=(jax.ShapeDtypeStruct((1, Hp), f32),
                   jax.ShapeDtypeStruct((1, Hp), f32)),
        grid=grid,
        in_specs=[
            pl.BlockSpec((TM, Din), lambda i: (i, 0)),
            pl.BlockSpec((Din, Hp), lambda i: (0, 0)),   # resident
            pl.BlockSpec((1, Hp), lambda i: (0, 0)),     # resident
        ],
        out_specs=(pl.BlockSpec((1, Hp), lambda i: (0, 0)),
                   pl.BlockSpec((1, Hp), lambda i: (0, 0))),
        scratch_shapes=[pltpu.VMEM((1, Hp), f32),
                        pltpu.VMEM((1, Hp), f32)],
        compiler_params=pltpu.CompilerParams(
            dimension_semantics=("arbitrary",),
            vmem_limit_bytes=vmem_limit),
        cost_estimate=pl.CostEstimate(
            flops=2 * Mp * Din * Hp,
            transcendentals=0,
            bytes_accessed=4 * (Mp * Din + Din * Hp + 3 * Hp)),
    )(x2, w1p, b1p)

    # ---- fold BN (training batch stats, biased variance) into fc1 ----------
    mean = s / M
    var = jnp.maximum(ss / M - mean * mean, 0.0)   # clamp tiny negative cancellation
    a = gammap * jax.lax.rsqrt(var + eps)          # BN scale  (padded channels: 0)
    c = betap - mean * a                           # BN shift  (padded channels: 0)
    w1f = w1p * a                                  # (Din, Hp) * (1, Hp)
    b1f = b1p * a + c

    # ---- pass 2: fused fc1' -> ReLU -> fc2, parallel over row tiles --------
    out = pl.pallas_call(
        _fused_kernel,
        out_shape=jax.ShapeDtypeStruct((Mp, Ep), x.dtype),
        grid=grid,
        in_specs=[
            pl.BlockSpec((TM, Din), lambda i: (i, 0)),
            pl.BlockSpec((Din, Hp), lambda i: (0, 0)),   # resident
            pl.BlockSpec((1, Hp), lambda i: (0, 0)),     # resident
            pl.BlockSpec((Hp, Ep), lambda i: (0, 0)),    # resident
            pl.BlockSpec((1, Ep), lambda i: (0, 0)),     # resident
        ],
        out_specs=pl.BlockSpec((TM, Ep), lambda i: (i, 0)),
        compiler_params=pltpu.CompilerParams(
            dimension_semantics=("parallel",),           # megacore-splittable
            vmem_limit_bytes=vmem_limit),
        cost_estimate=pl.CostEstimate(
            flops=2 * Mp * (Din * Hp + Hp * Ep),
            transcendentals=0,
            bytes_accessed=4 * (Mp * Din + Din * Hp + Hp * Ep + Mp * Ep)),
    )(x2, w1f, b1f, w2p, b2p)

    return out[:M, :E].reshape(B, N, E)


# ---------------------------------------------------------------------------
# Parameters + pure-JAX reference (matches PyTorch forward, use_bn, training).
# ---------------------------------------------------------------------------
def make_params(key, input_dim, intermediate_layer, embedding_size):
    k1, k2, k3, k4 = jax.random.split(key, 4)
    bound1 = 1.0 / (input_dim ** 0.5)
    bound2 = 1.0 / (intermediate_layer ** 0.5)
    # Stored transposed: (in, out) so kernels do x @ W.
    w1 = jax.random.uniform(k1, (input_dim, intermediate_layer),
                            jnp.float32, -bound1, bound1)
    b1 = jax.random.uniform(k2, (1, intermediate_layer),
                            jnp.float32, -bound1, bound1)
    w2 = jax.random.uniform(k3, (intermediate_layer, embedding_size),
                            jnp.float32, -bound2, bound2)
    b2 = jax.random.uniform(k4, (1, embedding_size),
                            jnp.float32, -bound2, bound2)
    gamma = jnp.ones((1, intermediate_layer), jnp.float32)   # BN weight
    beta = jnp.zeros((1, intermediate_layer), jnp.float32)   # BN bias
    return w1, b1, gamma, beta, w2, b2


def reference_forward(x, w1, b1, gamma, beta, w2, b2, eps=1e-5):
    h = jnp.einsum('bnd,dh->bnh', x, w1) + b1[0]
    mean = jnp.mean(h, axis=(0, 1), keepdims=True)
    var = jnp.mean((h - mean) ** 2, axis=(0, 1), keepdims=True)  # biased
    h = (h - mean) / jnp.sqrt(var + eps) * gamma[0] + beta[0]
    h = jnp.maximum(h, 0.0)
    return jnp.einsum('bnh,he->bne', h, w2) + b2[0]


if __name__ == "__main__":
    B, N = 2, 8                 # batch, nodes
    input_dim = 16
    intermediate_layer = 32
    embedding_size = 8

    key = jax.random.PRNGKey(0)
    kx, kp = jax.random.split(key)
    x = jax.random.normal(kx, (B, N, input_dim), jnp.float32)
    params = make_params(kp, input_dim, intermediate_layer, embedding_size)

    out = node_decoder_forward(x, *params)
    out = jax.block_until_ready(out)

    ref = reference_forward(x, *params)
    assert out.shape == (B, N, embedding_size)
    assert jnp.allclose(out, ref, atol=2e-4, rtol=2e-4), "mismatch vs reference"

    print("KERNEL_OK")
</pallas_src>

<mosaic_0001>
module attributes {stable_mosaic.version = 11 : i64} {
  func.func @_stats_kernel(%arg0: i32, %arg1: memref<16x16xf32, #tpu.memory_space<vmem>>, %arg2: memref<16x128xf32, #tpu.memory_space<vmem>>, %arg3: memref<1x128xf32, #tpu.memory_space<vmem>>, %arg4: memref<1x128xf32, #tpu.memory_space<vmem>>, %arg5: memref<1x128xf32, #tpu.memory_space<vmem>>, %arg6: memref<1x128xf32, #tpu.memory_space<vmem>>, %arg7: memref<1x128xf32, #tpu.memory_space<vmem>>) attributes {dimension_semantics = [#tpu.dimension_semantics<arbitrary>], iteration_bounds = array<i64: 1>, scalar_prefetch = 0 : i64, scratch_operands = 2 : i64, tpu.core_type = #tpu.core_type<tc>, window_params = [{transform_indices = @transform_0, window_bounds = array<i64: 16, 16>}, {pipeline_mode = #tpu.pipeline_mode<synchronous>, transform_indices = @transform_1, window_bounds = array<i64: 16, 128>}, {pipeline_mode = #tpu.pipeline_mode<synchronous>, transform_indices = @transform_2, window_bounds = array<i64: 1, 128>}, {pipeline_mode = #tpu.pipeline_mode<synchronous>, transform_indices = @transform_3, window_bounds = array<i64: 1, 128>}, {pipeline_mode = #tpu.pipeline_mode<synchronous>, transform_indices = @transform_4, window_bounds = array<i64: 1, 128>}]} {
    %c0_i32 = arith.constant 0 : i32
    %0 = arith.cmpi eq, %arg0, %c0_i32 : i32
    %1 = arith.extui %0 : i1 to i32
    %c0_i32_0 = arith.constant 0 : i32
    %2 = arith.cmpi ne, %1, %c0_i32_0 : i32
    scf.if %2 {
      %cst_20 = arith.constant 0.000000e+00 : f32
      %33 = vector.broadcast %cst_20 : f32 to vector<1x128xf32>
      %c0_21 = arith.constant 0 : index
      %c0_22 = arith.constant 0 : index
      %34 = vector.load %arg6[%c0_21, %c0_22] : memref<1x128xf32, #tpu.memory_space<vmem>>, vector<1x128xf32>
      tpu.vector_store %arg6[%c0_21, %c0_22], %33 {strides = array<i32>} : memref<1x128xf32, #tpu.memory_space<vmem>>, vector<1x128xf32>,
      %cst_23 = arith.constant 0.000000e+00 : f32
      %35 = vector.broadcast %cst_23 : f32 to vector<1x128xf32>
      %c0_24 = arith.constant 0 : index
      %c0_25 = arith.constant 0 : index
      %36 = vector.load %arg7[%c0_24, %c0_25] : memref<1x128xf32, #tpu.memory_space<vmem>>, vector<1x128xf32>
      tpu.vector_store %arg7[%c0_24, %c0_25], %35 {strides = array<i32>} : memref<1x128xf32, #tpu.memory_space<vmem>>, vector<1x128xf32>,
    } else {
    }
    %c0 = arith.constant 0 : index
    %c0_1 = arith.constant 0 : index
    %3 = vector.load %arg1[%c0, %c0_1] : memref<16x16xf32, #tpu.memory_space<vmem>>, vector<16x16xf32>
    %c0_2 = arith.constant 0 : index
    %c0_3 = arith.constant 0 : index
    %4 = vector.load %arg2[%c0_2, %c0_3] : memref<16x128xf32, #tpu.memory_space<vmem>>, vector<16x128xf32>
    %cst = arith.constant dense<0.000000e+00> : vector<16x128xf32>
    %5 = tpu.matmul %3, %4, %cst {dimension_numbers = #tpu.dot_dimension_numbers<[1], [0], [0], [1], [0, 0, 1, 1], [], []>} : vector<16x16xf32>, vector<16x128xf32>, vector<16x128xf32> -> vector<16x128xf32>
    %c0_4 = arith.constant 0 : index
    %c0_5 = arith.constant 0 : index
    %6 = vector.load %arg3[%c0_4, %c0_5] : memref<1x128xf32, #tpu.memory_space<vmem>>, vector<1x128xf32>
    %7 = vector.broadcast %6 : vector<1x128xf32> to vector<16x128xf32>
    %8 = arith.addf %5, %7 : vector<16x128xf32>
    %c16_i32 = arith.constant 16 : i32
    %9 = arith.muli %arg0, %c16_i32 : i32
    %10 = tpu.iota {dimensions = array<i32: 0>} : vector<16x1xi32>
    %11 = vector.broadcast %9 : i32 to vector<16x1xi32>
    %12 = arith.addi %11, %10 : vector<16x1xi32>
    %c16_i32_6 = arith.constant 16 : i32
    %13 = vector.broadcast %c16_i32_6 : i32 to vector<16x1xi32>
    %14 = arith.cmpi slt, %12, %13 : vector<16x1xi32>
    %cst_7 = arith.constant 0.000000e+00 : f32
    %15 = vector.shape_cast %14 : vector<16x1xi1> to vector<16x1xi1>
    %16 = vector.broadcast %15 : vector<16x1xi1> to vector<16x128xi1>
    %17 = vector.broadcast %cst_7 : f32 to vector<16x128xf32>
    %18 = arith.select %16, %8, %17 : vector<16x128xi1>, vector<16x128xf32>
    %c0_8 = arith.constant 0 : index
    %c0_9 = arith.constant 0 : index
    %19 = vector.load %arg6[%c0_8, %c0_9] : memref<1x128xf32, #tpu.memory_space<vmem>>, vector<1x128xf32>
    %cst_10 = arith.constant dense<0.000000e+00> : vector<128xf32>
    %20 = vector.multi_reduction <add>, %18, %cst_10 [0] : vector<16x128xf32> to vector<128xf32>
    %21 = vector.shape_cast %20 : vector<128xf32> to vector<1x128xf32>
    %22 = arith.addf %19, %21 : vector<1x128xf32>
    %c0_11 = arith.constant 0 : index
    %c0_12 = arith.constant 0 : index
    %23 = vector.load %arg6[%c0_11, %c0_12] : memref<1x128xf32, #tpu.memory_space<vmem>>, vector<1x128xf32>
    tpu.vector_store %arg6[%c0_11, %c0_12], %22 {strides = array<i32>} : memref<1x128xf32, #tpu.memory_space<vmem>>, vector<1x128xf32>,
    %c0_13 = arith.constant 0 : index
    %c0_14 = arith.constant 0 : index
    %24 = vector.load %arg7[%c0_13, %c0_14] : memref<1x128xf32, #tpu.memory_space<vmem>>, vector<1x128xf32>
    %25 = arith.mulf %18, %18 : vector<16x128xf32>
    %cst_15 = arith.constant dense<0.000000e+00> : vector<128xf32>
    %26 = vector.multi_reduction <add>, %25, %cst_15 [0] : vector<16x128xf32> to vector<128xf32>
    %27 = vector.shape_cast %26 : vector<128xf32> to vector<1x128xf32>
    %28 = arith.addf %24, %27 : vector<1x128xf32>
    %c0_16 = arith.constant 0 : index
    %c0_17 = arith.constant 0 : index
    %29 = vector.load %arg7[%c0_16, %c0_17] : memref<1x128xf32, #tpu.memory_space<vmem>>, vector<1x128xf32>
    tpu.vector_store %arg7[%c0_16, %c0_17], %28 {strides = array<i32>} : memref<1x128xf32, #tpu.memory_space<vmem>>, vector<1x128xf32>,
    %c0_i32_18 = arith.constant 0 : i32
    %30 = arith.cmpi eq, %arg0, %c0_i32_18 : i32
    %31 = arith.extui %30 : i1 to i32
    %c0_i32_19 = arith.constant 0 : i32
    %32 = arith.cmpi ne, %31, %c0_i32_19 : i32
    scf.if %32 {
      %c0_20 = arith.constant 0 : index
      %c0_21 = arith.constant 0 : index
      %33 = vector.load %arg6[%c0_20, %c0_21] : memref<1x128xf32, #tpu.memory_space<vmem>>, vector<1x128xf32>
      %c0_22 = arith.constant 0 : index
      %c0_23 = arith.constant 0 : index
      %34 = vector.load %arg4[%c0_22, %c0_23] : memref<1x128xf32, #tpu.memory_space<vmem>>, vector<1x128xf32>
      tpu.vector_store %arg4[%c0_22, %c0_23], %33 {strides = array<i32>} : memref<1x128xf32, #tpu.memory_space<vmem>>, vector<1x128xf32>,
      %c0_24 = arith.constant 0 : index
      %c0_25 = arith.constant 0 : index
      %35 = vector.load %arg7[%c0_24, %c0_25] : memref<1x128xf32, #tpu.memory_space<vmem>>, vector<1x128xf32>
      %c0_26 = arith.constant 0 : index
      %c0_27 = arith.constant 0 : index
      %36 = vector.load %arg5[%c0_26, %c0_27] : memref<1x128xf32, #tpu.memory_space<vmem>>, vector<1x128xf32>
      tpu.vector_store %arg5[%c0_26, %c0_27], %35 {strides = array<i32>} : memref<1x128xf32, #tpu.memory_space<vmem>>, vector<1x128xf32>,
    } else {
    }
    return
  }
  func.func @transform_0(%arg0: i32) -> (i32, i32) {
    %c0_i32 = arith.constant 0 : i32
    %c0_i32_0 = arith.constant 0 : i32
    return %arg0, %c0_i32 : i32, i32
  }
  func.func @transform_1(%arg0: i32) -> (i32, i32) {
    %c0_i32 = arith.constant 0 : i32
    %c0_i32_0 = arith.constant 0 : i32
    %c0_i32_1 = arith.constant 0 : i32
    return %c0_i32, %c0_i32_0 : i32, i32
  }
  func.func @transform_2(%arg0: i32) -> (i32, i32) {
    %c0_i32 = arith.constant 0 : i32
    %c0_i32_0 = arith.constant 0 : i32
    %c0_i32_1 = arith.constant 0 : i32
    return %c0_i32, %c0_i32_0 : i32, i32
  }
  func.func @transform_3(%arg0: i32) -> (i32, i32) {
    %c0_i32 = arith.constant 0 : i32
    %c0_i32_0 = arith.constant 0 : i32
    %c0_i32_1 = arith.constant 0 : i32
    return %c0_i32, %c0_i32_0 : i32, i32
  }
  func.func @transform_4(%arg0: i32) -> (i32, i32) {
    %c0_i32 = arith.constant 0 : i32
    %c0_i32_0 = arith.constant 0 : i32
    %c0_i32_1 = arith.constant 0 : i32
    return %c0_i32, %c0_i32_0 : i32, i32
  }
}

</mosaic_0001>

<llo_original>
// kernel: tpu_custom_call.1
$region0: #{tpu_custom_call.1}
  #allocation0 [shape = 'u32[]', space=smem, size = 0x4, offset = 0x4, fixed_abs, tag = 'smem constant byte address 0x4 - core index']
  #allocation1 [shape = 'u32[144,128]{1,0:T(1,128)}', space=vmem, size = 0x12000, scoped, tag = 'internal scratch']
  #allocation2 [shape = 'f32[1,128]{1,0:T(1,128)}', space=vmem, size = 0x200, scoped, tag = 'scratch operand']
  #allocation3 [shape = 'f32[1,128]{1,0:T(1,128)}', space=vmem, size = 0x200, scoped, tag = 'scratch operand']
  %s0 = inlined_call_operand.hbm [shape: f32[16,16], index: 0, kind: input, shape index: {}]
  %s1 = inlined_call_operand.hbm [shape: f32[16,128], index: 1, kind: input, shape index: {}]
  %s2 = inlined_call_operand.vmem [shape: f32[1,128], index: 2, kind: input, shape index: {}]
  %s3 = inlined_call_operand.hbm [shape: f32[1,128], index: 3, kind: output, shape index: {0}]
  %s4 = inlined_call_operand.hbm [shape: f32[1,128], index: 4, kind: output, shape index: {1}]
  %5 = xla_tuple %s3, %s4
  %s6 = sld [smem:[#allocation0]]
  $region46: #{tpu_custom_call.1} parent=0
    _
  %s8 = ssub.s32 1, %s6
  %s9 = scalar_select 0, %s8, %s6
  $region1: #{tpu_custom_call.1} parent=0
    #allocation4 [shape = 'u8[8192]{0}', space=vmem, size = 0x2000, scoped, tag = 'input window, operand 0, single buffered']
    #allocation5 [shape = 's32[1]{0}', space=sflag, size = 0x4, scoped, tag = 'scoped memory for tpu_custom_call.1']
    #allocation6 [shape = 's32[1]{0}', space=sflag, size = 0x4, scoped, tag = 'scoped memory for tpu_custom_call.1']
    #allocation7 [shape = 'u8[8192]{0}', space=vmem, size = 0x2000, scoped, tag = 'input window, operand 1, single buffered']
    #allocation8 [shape = 's32[1]{0}', space=sflag, size = 0x4, scoped, tag = 'scoped memory for tpu_custom_call.1']
    #allocation9 [shape = 'u8[512]{0}', space=vmem, size = 0x400, scoped, tag = 'output window, operand 0, single buffered']
    #allocation10 [shape = 'u8[512]{0}', space=vmem, size = 0x400, scoped, tag = 'output window, operand 1, single buffered']
    #allocation11 [shape = 's32[1]{0}', space=sflag, size = 0x4, scoped, tag = 'scoped memory for tpu_custom_call.1']
    %10 = vsyncpa [#allocation5], 0
    %11 = vsyncpa [#allocation8], 0
    %12 = vsyncpa [#allocation6], 0
    %13 = vsyncpa [#allocation11], 0
    // Predicated region
    $region2: #{tpu_custom_call.1} parent=1 // pred_check
      _
    $region3: #{tpu_custom_call.1} parent=1 // pred_check_branch
      %15 = sbr.rel (0) target = $region5
    $region4: #{tpu_custom_call.1} parent=1 // pred_region
      %s17 = ssub.s32 256, 256
      %18 = vsyncadd [#allocation5], %s17
      %s19 = sshll.u32 [#allocation4], 4
      %s20 = int_to_ptr.vmem [resolvable:$true] %s19
      %25 = dma.hbm_to_vmem [thread:$0]  %s0, 256, %s20, [#allocation5], 128, 128, 8
    $region5: #{tpu_custom_call.1} parent=1 // pred_fallthru
      _
    // Predicated region
    $region6: #{tpu_custom_call.1} parent=1 // pred_check
      _
    $region7: #{tpu_custom_call.1} parent=1 // pred_check_branch
      %27 = sbr.rel (0) target = $region9
    $region8: #{tpu_custom_call.1} parent=1 // pred_region
      %s29 = ssub.s32 256, 256
      %30 = vsyncadd [#allocation8], %s29
      %s31 = sshll.u32 [#allocation7], 4
      %s32 = int_to_ptr.vmem [resolvable:$true] %s31
      %37 = dma.hbm_to_vmem [thread:$0]  %s1, 256, %s32, [#allocation8], 128, 128, 8
    $region9: #{tpu_custom_call.1} parent=1 // pred_fallthru
      _
    // Predicated region
    $region10: #{tpu_custom_call.1} parent=1 // pred_check
      _
    $region11: #{tpu_custom_call.1} parent=1 // pred_check_branch
      %39 = sbr.rel (0) target = $region13
    $region12: #{tpu_custom_call.1} parent=1 // pred_region
      _
    $region13: #{tpu_custom_call.1} parent=1 // pred_fallthru
      _
    // Predicated region
    $region14: #{tpu_custom_call.1} parent=1 // pred_check
      _
    $region15: #{tpu_custom_call.1} parent=1 // pred_check_branch
      %41 = sbr.rel (0) target = $region17
    $region16: #{tpu_custom_call.1} parent=1 // pred_region
      %42 = dma.done [#allocation5], 256
    $region17: #{tpu_custom_call.1} parent=1 // pred_fallthru
      _
    // Predicated region
    $region18: #{tpu_custom_call.1} parent=1 // pred_check
      _
    $region19: #{tpu_custom_call.1} parent=1 // pred_check_branch
      %44 = sbr.rel (0) target = $region21
    $region20: #{tpu_custom_call.1} parent=1 // pred_region
      %45 = dma.done [#allocation8], 256
    $region21: #{tpu_custom_call.1} parent=1 // pred_fallthru
      _
    %p46 = scmp.eq.s32.totalorder 0, 0
    // Predicated region
    $region22: #{tpu_custom_call.1} parent=1 // pred_check
      %p47 = pneg %p46
    $region23: #{tpu_custom_call.1} parent=1 // pred_check_branch
      %49 = sbr.rel (%p47) target = $region25
    $region24: #{tpu_custom_call.1} parent=1 // pred_region
      %50 = vst [vmem:[#allocation2] sm:$0x1] 0.0
      %51 = vst [vmem:[#allocation3] sm:$0x1] 0.0
    $region25: #{tpu_custom_call.1} parent=1 // pred_fallthru
      _
    %v52 = vld [vmem:[#allocation4] sm:$0xff]
    %v53 = vld [vmem:[#allocation4 + $0x8] sm:$0xff]
    %v54 = vld [vmem:[#allocation7] sm:$0xff]
    %v55 = vld [vmem:[#allocation7 + $0x8] sm:$0xff]
    %v56 = vld [vmem:[%s2] sm:$0x1]
    %v58 = vlaneseq
    %v59 = vshrl.u32 %v58, 7
    %v60 = vsub.s32 0, %v59
    %v61 = vrot.slane %v56, %v60
    %vm63 = vcmask 130048
    %v65 = vsel %vm63, %v52, 0
    %v68 = vsel %vm63, %v53, 0
    %70 = vmatprep.subr.mxu0 0.0
    %71 = vmatpush1.msra.mxu0 0.0
    %72 = vmatprep.subr.mxu0 0.0
    %73 = vmatpush1.msra.mxu0 0.0
    %74 = vmatprep.subr.mxu0 0.0
    %75 = vmatpush1.msra.mxu0 0.0
    %76 = vmatprep.subr.mxu0 0.0
    %77 = vmatpush1.msra.mxu0 0.0
    %78 = vmatprep.subr.mxu0 0.0
    %79 = vmatpush1.msra.mxu0 0.0
    %80 = vmatprep.subr.mxu0 0.0
    %81 = vmatpush1.msra.mxu0 0.0
    %82 = vmatprep.subr.mxu0 0.0
    %83 = vmatpush1.msra.mxu0 0.0
    %84 = vmatprep.subr.mxu0 0.0
    %85 = vmatpush1.msra.mxu0 0.0
    %86 = vmatprep.subr.mxu0 0.0
    %87 = vmatpush1.msra.mxu0 0.0
    %88 = vmatprep.subr.mxu0 0.0
    %89 = vmatpush1.msra.mxu0 0.0
    %90 = vmatprep.subr.mxu0 0.0
    %91 = vmatpush1.msra.mxu0 0.0
    %92 = vmatprep.subr.mxu0 0.0
    %93 = vmatpush1.msra.mxu0 0.0
    %94 = vmatprep.subr.mxu0 0.0
    %95 = vmatpush1.msra.mxu0 0.0
    %96 = vmatprep.subr.mxu0 0.0
    %97 = vmatpush1.msra.mxu0 0.0
    %98 = vmatprep.subr.mxu0 0.0
    %99 = vmatpush1.msra.mxu0 %v55
    %100 = vmatprep.subr.mxu0 0.0
    %101 = vmatpush1.msra.mxu0 %v54
    %102 = vmatprep.subr.mxu0 0.0
    %103 = vmatpush2.msra.mxu0 0.0
    %104 = vmatprep.subr.mxu0 0.0
    %105 = vmatpush2.msra.mxu0 0.0
    %106 = vmatprep.subr.mxu0 0.0
    %107 = vmatpush2.msra.mxu0 0.0
    %108 = vmatprep.subr.mxu0 0.0
    %109 = vmatpush2.msra.mxu0 0.0
    %110 = vmatprep.subr.mxu0 0.0
    %111 = vmatpush2.msra.mxu0 0.0
    %112 = vmatprep.subr.mxu0 0.0
    %113 = vmatpush2.msra.mxu0 0.0
    %114 = vmatprep.subr.mxu0 0.0
    %115 = vmatpush2.msra.mxu0 0.0
    %116 = vmatprep.subr.mxu0 0.0
    %117 = vmatpush2.msra.mxu0 0.0
    %118 = vmatprep.subr.mxu0 0.0
    %119 = vmatpush2.msra.mxu0 0.0
    %120 = vmatprep.subr.mxu0 0.0
    %121 = vmatpush2.msra.mxu0 0.0
    %122 = vmatprep.subr.mxu0 0.0
    %123 = vmatpush2.msra.mxu0 0.0
    %124 = vmatprep.subr.mxu0 0.0
    %125 = vmatpush2.msra.mxu0 0.0
    %126 = vmatprep.subr.mxu0 0.0
    %127 = vmatpush2.msra.mxu0 0.0
    %128 = vmatprep.subr.mxu0 0.0
    %129 = vmatpush2.msra.mxu0 0.0
    %130 = vmatprep.subr.mxu0 0.0
    %131 = vmatpush2.msra.mxu0 0.0
    %132 = vmatprep.subr.mxu0 0.0
    %133 = vmatpush2.msra.mxu0 0.0
    %134 = vmatprep.mubr.f32.mxu0 0.0
    %135 = vmatmul.mubr.f32.gmra.mxu0 %v65
    %v136 = vpop.f32.mrf.mxu0
    %v137 = vadd.f32 %v61, %v136
    %v138 = vpop.f32.mrf.mxu0
    %139 = vmatprep.mubr.f32.mxu0 0.0
    %140 = vmatmul.mubr.f32.gmra.mxu0 %v68
    %v141 = vpop.f32.mrf.mxu0
    %v142 = vadd.f32 %v61, %v141
    %v143 = vpop.f32.mrf.mxu0
    %144 = vdwg.mxu0
    %s145 = smul.u32 0, 16
    %v146 = vlaneseq
    %v147 = vshrl.u32 %v146, 7
    %v148 = vadd.s32 %v147, 8
    %v149 = vstv %s145
    %v150 = vadd.s32 %v149, %v147
    %v151 = vadd.s32 %v149, %v148
    %vm152 = vcmp.lt.s32.totalorder %v150, 16
    %vm153 = vcmp.lt.s32.totalorder %v151, 16
    %v154 = vsel %vm152, 1, 0
    %v155 = vsel %vm153, 1, 0
    %vm156 = vcmp.eq.s32.totalorder %v154, 1
    %vm157 = vcmp.eq.s32.totalorder %v155, 1
    %v158 = vsel %vm156, %v137, 0.0
    %v159 = vsel %vm157, %v142, 0.0
    %v160 = vld [vmem:[#allocation2] sm:$0x1]
    %v161 = vadd.f32 %v158, %v159
    %v162 = vrot.slane %v161, 4
    %v163 = vadd.f32 %v161, %v162
    %v164 = vrot.slane %v163, 2
    %v165 = vadd.f32 %v163, %v164
    %v166 = vrot.slane %v165, 1
    %v167 = vadd.f32 %v165, %v166
    %v168 = vadd.f32 %v160, %v167
    %169 = vst [vmem:[#allocation2] sm:$0x1] %v168
    %v170 = vld [vmem:[#allocation3] sm:$0x1]
    %v171 = vmul.f32 %v158, %v158
    %v172 = vmul.f32 %v159, %v159
    %v173 = vadd.f32 %v171, %v172
    %v174 = vrot.slane %v173, 4
    %v175 = vadd.f32 %v173, %v174
    %v176 = vrot.slane %v175, 2
    %v177 = vadd.f32 %v175, %v176
    %v178 = vrot.slane %v177, 1
    %v179 = vadd.f32 %v177, %v178
    %v180 = vadd.f32 %v170, %v179
    %181 = vst [vmem:[#allocation3] sm:$0x1] %v180
    // Predicated region
    $region26: #{tpu_custom_call.1} parent=1 // pred_check
      %p182 = pneg %p46
    $region27: #{tpu_custom_call.1} parent=1 // pred_check_branch
      %184 = sbr.rel (%p182) target = $region29
    $region28: #{tpu_custom_call.1} parent=1 // pred_region
      %v185 = vld [vmem:[#allocation2] sm:$0x1]
      %186 = vst [vmem:[#allocation9] sm:$0x1] %v185
      %v187 = vld [vmem:[#allocation3] sm:$0x1]
      %188 = vst [vmem:[#allocation10] sm:$0x1] %v187
    $region29: #{tpu_custom_call.1} parent=1 // pred_fallthru
      _
    // Predicated region
    $region30: #{tpu_custom_call.1} parent=1 // pred_check
      _
    $region31: #{tpu_custom_call.1} parent=1 // pred_check_branch
      %190 = sbr.rel (0) target = $region33
    $region32: #{tpu_custom_call.1} parent=1 // pred_region
      %s192 = ssub.s32 16, 16
      %193 = vsyncadd [#allocation6], %s192
      %s195 = sshll.u32 [#allocation9], 4
      %s196 = int_to_ptr.vmem [resolvable:$true] %s195
      %198 = dma.vmem_to_hbm [thread:$0]  %s196, 16, %s3, [#allocation6]
    $region33: #{tpu_custom_call.1} parent=1 // pred_fallthru
      _
    // Predicated region
    $region34: #{tpu_custom_call.1} parent=1 // pred_check
      _
    $region35: #{tpu_custom_call.1} parent=1 // pred_check_branch
      %200 = sbr.rel (0) target = $region37
    $region36: #{tpu_custom_call.1} parent=1 // pred_region
      %s202 = ssub.s32 16, 16
      %203 = vsyncadd [#allocation11], %s202
      %s205 = sshll.u32 [#allocation10], 4
      %s206 = int_to_ptr.vmem [resolvable:$true] %s205
      %208 = dma.vmem_to_hbm [thread:$0]  %s206, 16, %s4, [#allocation11]
    $region37: #{tpu_custom_call.1} parent=1 // pred_fallthru
      _
    // Predicated region
    $region38: #{tpu_custom_call.1} parent=1 // pred_check
      _
    $region39: #{tpu_custom_call.1} parent=1 // pred_check_branch
      %210 = sbr.rel (0) target = $region41
    $region40: #{tpu_custom_call.1} parent=1 // pred_region
      %211 = dma.done [#allocation6], 16
    $region41: #{tpu_custom_call.1} parent=1 // pred_fallthru
      _
    // Predicated region
    $region42: #{tpu_custom_call.1} parent=1 // pred_check
      _
    $region43: #{tpu_custom_call.1} parent=1 // pred_check_branch
      %213 = sbr.rel (0) target = $region45
    $region44: #{tpu_custom_call.1} parent=1 // pred_region
      %214 = dma.done [#allocation11], 16
    $region45: #{tpu_custom_call.1} parent=1 // pred_fallthru
      _
    %215 = vsyncpa [#allocation5], 1
    %216 = vsyncpa [#allocation8], 1
    %217 = vsyncpa [#allocation6], 1
    %218 = vsyncpa [#allocation11], 1

</llo_original>
